<compile_context>
chip_gen: v6e
topology: v6e:2x2x1
jax: 0.10.0
libtpu: 0.0.40
codegen_flags: <defaults>
</compile_context>

<pallas_src>
import functools

import jax
import jax.numpy as jnp
from jax import lax
from jax.experimental import pallas as pl
from jax.experimental.pallas import tpu as pltpu

_LANE = 128
_SUBLANE = 8


def _round_up(x, m):
    return (x + m - 1) // m * m


def _padded_tile_bytes(shape, itemsize):
    """VMEM bytes of one buffer for `shape`, padded to (8,128) vreg tiles."""
    if len(shape) == 1:
        shape = (1,) + tuple(shape)
    lead = 1
    for d in shape[:-2]:
        lead *= int(d)
    r = _round_up(int(shape[-2]), _SUBLANE)
    c = _round_up(int(shape[-1]), _LANE)
    return lead * r * c * itemsize


def _head_kernel(xa_ref, w_ref, b_ref, out_ref, pooled_ref, acc_ref,
                 *, inv_s, chunk, sigmoid):
    # xa_ref:     (tb, C, ts)  natural layout; spatial chunk on lanes, channels on sublanes
    # w_ref:      (C, NC)      resident across the whole grid
    # b_ref:      (1, NC)
    # out_ref:    (tb, NC)     activation output (f32)
    # pooled_ref: (tb, C)      pooled features (input dtype)
    # acc_ref:    (tb, C)      f32 spatial-sum accumulator (VMEM scratch)
    k = pl.program_id(1)

    @pl.when(k == 0)
    def _init():
        acc_ref[...] = jnp.zeros_like(acc_ref)

    ts = xa_ref.shape[-1]
    if ts <= chunk:
        # Small tile: reduce the whole block in one go (lane-axis reduce -> (tb, C)).
        acc_ref[...] += jnp.sum(xa_ref[...].astype(jnp.float32), axis=-1)
    else:
        # Large tile: reduce in <=chunk-lane slices so the f32 upcast stays vreg-resident.
        n_chunks = ts // chunk  # wrapper guarantees chunk | ts on this path

        def body(i, carry):
            off = pl.multiple_of(i * chunk, chunk)
            xi = xa_ref[:, :, pl.ds(off, chunk)].astype(jnp.float32)
            acc_ref[...] += jnp.sum(xi, axis=-1)
            return carry

        lax.fori_loop(0, n_chunks, body, 0, unroll=n_chunks <= 8)

    @pl.when(k == pl.num_programs(1) - 1)
    def _finalize():
        pooled = acc_ref[...] * inv_s                     # mean over the true H*W
        pooled_ref[...] = pooled.astype(pooled_ref.dtype)

        logits = jnp.dot(pooled, w_ref[...],
                         preferred_element_type=jnp.float32) + b_ref[...]
        if sigmoid:
            probs = 1.0 / (1.0 + jnp.exp(-logits))
        else:
            m = jnp.max(logits, axis=-1, keepdims=True)
            e = jnp.exp(logits - m)
            probs = e / jnp.sum(e, axis=-1, keepdims=True)   # exact divide
        out_ref[...] = probs.astype(out_ref.dtype)


def base_av_head_audio_only(x, weight, bias, *, ts=None, activation="softmax"):
    """
    Args:
      x: dict with keys 'video' (unused) and 'audio' of shape (B, C_a, H, W).
      weight: (num_classes, dim_audio)  -- PyTorch nn.Linear layout.
      bias:   (num_classes,)
      ts: optional spatial chunk size (auto-chosen from a VMEM budget by default).
      activation: 'softmax' or 'sigmoid' (eval-mode activation of the module).
    Returns:
      (out, xa): out is (B, num_classes) float32 activation output,
                 xa is (B, dim_audio) pooled features in the input dtype.
    """
    xa = x["audio"]
    B, C, H, W = xa.shape
    num_classes = weight.shape[0]
    S = H * W
    itemsize = xa.dtype.itemsize

    # Natural layout (B, C, S): reshape is free (contiguous last dims), no transpose/pad copy.
    xa_r = xa.reshape(B, C, S)

    # Batch tiling: never pad the batch. A full-dim block is exempt from the (8,128) rule,
    # so small / odd batches get tb = B; only regular multiples of 8 get tiled.
    tb = 8 if (B > 8 and B % 8 == 0) else B
    n_b = B // tb

    # Generation-aware VMEM budget: ~48 MiB on v7x (64 MiB physical, conservative default),
    # ~96 MiB when the part reports 128 MiB (v5e/v6e).
    try:
        phys_vmem = pltpu.get_tpu_info().vmem_capacity_bytes
    except Exception:
        phys_vmem = 64 << 20
    budget = min(int(phys_vmem * 3) // 4, 100 << 20)

    # Exact accounting of the non-xa buffers (weight/bias/out/pooled double-buffered + scratch).
    fixed = (2 * _padded_tile_bytes((C, num_classes), 4)
             + 2 * _padded_tile_bytes((1, num_classes), 4)
             + 2 * _padded_tile_bytes((tb, num_classes), 4)
             + 2 * _padded_tile_bytes((tb, C), itemsize)
             + _padded_tile_bytes((tb, C), 4))
    avail = max(budget - fixed, 1 << 20)

    # Spatial chunk: full extent (single reduction step) if the double-buffered tile fits,
    # otherwise the largest 128-multiple that fits and evenly divides the (lightly) padded S.
    S_pad = S
    if ts is None:
        if 2 * tb * C * S * itemsize <= avail:
            ts = S
        else:
            S_pad = _round_up(S, _LANE)
            m_total = S_pad // _LANE
            m_max = max(1, avail // (2 * tb * C * _LANE * itemsize))
            m = 1
            for cand in range(min(m_total, m_max), 0, -1):
                if m_total % cand == 0:
                    m = cand
                    break
            ts = m * _LANE
    elif ts != S:
        ts = _round_up(min(ts, S), _LANE)
        S_pad = _round_up(S, ts)
    n_s = S_pad // ts

    if S_pad != S:
        # Rare path (huge feature maps only): zero-pad spatial to a tile multiple.
        # Zeros do not perturb the sum; we divide by the true S inside the kernel.
        xa_r = jnp.zeros((B, C, S_pad), xa.dtype).at[:, :, :S].set(xa_r)

    # Tiny parameter tensors: transpose to (C, NC) for the MXU, keep f32 for accuracy.
    w_t = jnp.asarray(weight, jnp.float32).T            # (C, NC)
    b_r = jnp.asarray(bias, jnp.float32).reshape(1, num_classes)

    # In-kernel reduction chunk (lanes) for large ts; must divide ts on the chunked path.
    if ts > 512 and ts % _LANE == 0:
        chunk = 512 if ts % 512 == 0 else (256 if ts % 256 == 0 else _LANE)
    else:
        chunk = ts

    vmem_need = 2 * _padded_tile_bytes((tb, C, ts), itemsize) + fixed
    vmem_limit = int(min(budget, max(vmem_need + (2 << 20), 8 << 20)))

    kernel = functools.partial(_head_kernel, inv_s=1.0 / float(S), chunk=chunk,
                               sigmoid=(activation == "sigmoid"))

    out, pooled = pl.pallas_call(
        kernel,
        out_shape=(
            jax.ShapeDtypeStruct((B, num_classes), jnp.float32),
            jax.ShapeDtypeStruct((B, C), xa.dtype),
        ),
        grid_spec=pltpu.PrefetchScalarGridSpec(
            num_scalar_prefetch=0,
            grid=(n_b, n_s),
            in_specs=[
                pl.BlockSpec((tb, C, ts), lambda b, k: (b, 0, k)),
                pl.BlockSpec((C, num_classes), lambda b, k: (0, 0)),   # resident
                pl.BlockSpec((1, num_classes), lambda b, k: (0, 0)),   # resident
            ],
            out_specs=(
                pl.BlockSpec((tb, num_classes), lambda b, k: (b, 0)),
                pl.BlockSpec((tb, C), lambda b, k: (b, 0)),
            ),
            scratch_shapes=[pltpu.VMEM((tb, C), jnp.float32)],
        ),
        compiler_params=pltpu.CompilerParams(
            dimension_semantics=("parallel", "arbitrary"),
            vmem_limit_bytes=vmem_limit,
        ),
    )(xa_r, w_t, b_r)

    return out, pooled


if __name__ == "__main__":
    # Small, deterministic config consistent with the module:
    #   dim_audio = 32 (AUDIO.BACKBONE.NUM_OUT_FEATURES)
    #   num_classes = 16 (VIDEO.HEAD.NUM_CLASSES)
    #   audio feature map: (B, dim_audio, T_mel, F_mel) = (2, 32, 16, 16)
    B, C_A, H, W = 2, 32, 16, 16
    NUM_CLASSES = 16

    key = jax.random.PRNGKey(0)
    k_a, k_v, k_w, k_b = jax.random.split(key, 4)

    audio = jax.random.normal(k_a, (B, C_A, H, W), dtype=jnp.float32)
    video = jax.random.normal(k_v, (B, 64, 4, 8, 8), dtype=jnp.float32)  # unused by this head
    weight = jax.random.normal(k_w, (NUM_CLASSES, C_A), dtype=jnp.float32) * 0.05
    bias = jax.random.normal(k_b, (NUM_CLASSES,), dtype=jnp.float32) * 0.01

    # Production path: auto tile sizes (single reduction step at these shapes).
    out, xa_pooled = base_av_head_audio_only(
        {"video": video, "audio": audio}, weight, bias)
    jax.block_until_ready((out, xa_pooled))

    # Pure-JAX reference.
    ref_pooled = jnp.mean(audio, axis=(2, 3))
    ref_logits = ref_pooled @ weight.T + bias
    ref_out = jax.nn.softmax(ref_logits, axis=-1)

    assert out.shape == (B, NUM_CLASSES) and xa_pooled.shape == (B, C_A)
    assert jnp.allclose(xa_pooled, ref_pooled, atol=1e-5, rtol=1e-5)
    assert jnp.allclose(out, ref_out, atol=1e-4, rtol=1e-4)

    # Correctness-only check of the multi-step spatial reduction (accumulator) path.
    out2, pooled2 = base_av_head_audio_only(
        {"video": video, "audio": audio}, weight, bias, ts=128)
    jax.block_until_ready((out2, pooled2))
    assert jnp.allclose(pooled2, ref_pooled, atol=1e-5, rtol=1e-5)
    assert jnp.allclose(out2, ref_out, atol=1e-4, rtol=1e-4)

    print("KERNEL_OK")
</pallas_src>

<mosaic_0001>
module attributes {stable_mosaic.version = 11 : i64} {
  func.func @_head_kernel(%arg0: i32, %arg1: i32, %arg2: memref<2x32x256xf32, #tpu.memory_space<vmem>>, %arg3: memref<32x16xf32, #tpu.memory_space<vmem>>, %arg4: memref<1x16xf32, #tpu.memory_space<vmem>>, %arg5: memref<2x16xf32, #tpu.memory_space<vmem>>, %arg6: memref<2x32xf32, #tpu.memory_space<vmem>>, %arg7: memref<2x32xf32, #tpu.memory_space<vmem>>) attributes {dimension_semantics = [#tpu.dimension_semantics<parallel>, #tpu.dimension_semantics<arbitrary>], iteration_bounds = array<i64: 1, 1>, scalar_prefetch = 0 : i64, scratch_operands = 1 : i64, tpu.core_type = #tpu.core_type<tc>, window_params = [{transform_indices = @transform_0, window_bounds = array<i64: 2, 32, 256>}, {pipeline_mode = #tpu.pipeline_mode<synchronous>, transform_indices = @transform_1, window_bounds = array<i64: 32, 16>}, {pipeline_mode = #tpu.pipeline_mode<synchronous>, transform_indices = @transform_2, window_bounds = array<i64: 1, 16>}, {transform_indices = @transform_3, window_bounds = array<i64: 2, 16>}, {transform_indices = @transform_4, window_bounds = array<i64: 2, 32>}]} {
    %c0_i32 = arith.constant 0 : i32
    %0 = arith.cmpi eq, %arg1, %c0_i32 : i32
    %1 = arith.extui %0 : i1 to i32
    %c0_i32_0 = arith.constant 0 : i32
    %2 = arith.cmpi ne, %1, %c0_i32_0 : i32
    scf.if %2 {
      %cst_9 = arith.constant 0.000000e+00 : f32
      %11 = vector.broadcast %cst_9 : f32 to vector<2x32xf32>
      %c0_10 = arith.constant 0 : index
      %c0_11 = arith.constant 0 : index
      %12 = vector.load %arg7[%c0_10, %c0_11] : memref<2x32xf32, #tpu.memory_space<vmem>>, vector<2x32xf32>
      tpu.vector_store %arg7[%c0_10, %c0_11], %11 {strides = array<i32>} : memref<2x32xf32, #tpu.memory_space<vmem>>, vector<2x32xf32>,
    } else {
    }
    %c0 = arith.constant 0 : index
    %c0_1 = arith.constant 0 : index
    %3 = vector.load %arg7[%c0, %c0_1] : memref<2x32xf32, #tpu.memory_space<vmem>>, vector<2x32xf32>
    %c0_2 = arith.constant 0 : index
    %c0_3 = arith.constant 0 : index
    %c0_4 = arith.constant 0 : index
    %4 = vector.load %arg2[%c0_2, %c0_3, %c0_4] : memref<2x32x256xf32, #tpu.memory_space<vmem>>, vector<2x32x256xf32>
    %cst = arith.constant dense<0.000000e+00> : vector<2x32xf32>
    %5 = vector.multi_reduction <add>, %4, %cst [2] : vector<2x32x256xf32> to vector<2x32xf32>
    %6 = arith.addf %3, %5 : vector<2x32xf32>
    %c0_5 = arith.constant 0 : index
    %c0_6 = arith.constant 0 : index
    %7 = vector.load %arg7[%c0_5, %c0_6] : memref<2x32xf32, #tpu.memory_space<vmem>>, vector<2x32xf32>
    tpu.vector_store %arg7[%c0_5, %c0_6], %6 {strides = array<i32>} : memref<2x32xf32, #tpu.memory_space<vmem>>, vector<2x32xf32>,
    %c0_i32_7 = arith.constant 0 : i32
    %8 = arith.cmpi eq, %arg1, %c0_i32_7 : i32
    %9 = arith.extui %8 : i1 to i32
    %c0_i32_8 = arith.constant 0 : i32
    %10 = arith.cmpi ne, %9, %c0_i32_8 : i32
    scf.if %10 {
      %c0_9 = arith.constant 0 : index
      %c0_10 = arith.constant 0 : index
      %11 = vector.load %arg7[%c0_9, %c0_10] : memref<2x32xf32, #tpu.memory_space<vmem>>, vector<2x32xf32>
      %cst_11 = arith.constant 3.906250e-03 : f32
      %12 = vector.broadcast %cst_11 : f32 to vector<2x32xf32>
      %13 = arith.mulf %11, %12 : vector<2x32xf32>
      %c0_12 = arith.constant 0 : index
      %c0_13 = arith.constant 0 : index
      %14 = vector.load %arg6[%c0_12, %c0_13] : memref<2x32xf32, #tpu.memory_space<vmem>>, vector<2x32xf32>
      tpu.vector_store %arg6[%c0_12, %c0_13], %13 {strides = array<i32>} : memref<2x32xf32, #tpu.memory_space<vmem>>, vector<2x32xf32>,
      %c0_14 = arith.constant 0 : index
      %c0_15 = arith.constant 0 : index
      %15 = vector.load %arg3[%c0_14, %c0_15] : memref<32x16xf32, #tpu.memory_space<vmem>>, vector<32x16xf32>
      %cst_16 = arith.constant dense<0.000000e+00> : vector<2x16xf32>
      %16 = tpu.matmul %13, %15, %cst_16 {dimension_numbers = #tpu.dot_dimension_numbers<[1], [0], [0], [1], [0, 0, 1, 1], [], []>} : vector<2x32xf32>, vector<32x16xf32>, vector<2x16xf32> -> vector<2x16xf32>
      %c0_17 = arith.constant 0 : index
      %c0_18 = arith.constant 0 : index
      %17 = vector.load %arg4[%c0_17, %c0_18] : memref<1x16xf32, #tpu.memory_space<vmem>>, vector<1x16xf32>
      %18 = vector.broadcast %17 : vector<1x16xf32> to vector<2x16xf32>
      %19 = arith.addf %16, %18 : vector<2x16xf32>
      %cst_19 = arith.constant dense<0xFF800000> : vector<2xf32>
      %20 = vector.multi_reduction <maximumf>, %19, %cst_19 [1] : vector<2x16xf32> to vector<2xf32>
      %21 = vector.shape_cast %20 : vector<2xf32> to vector<2x1xf32>
      %22 = vector.broadcast %21 : vector<2x1xf32> to vector<2x16xf32>
      %23 = arith.subf %19, %22 : vector<2x16xf32>
      %24 = math.exp %23 : vector<2x16xf32>
      %cst_20 = arith.constant dense<0.000000e+00> : vector<2xf32>
      %25 = vector.multi_reduction <add>, %24, %cst_20 [1] : vector<2x16xf32> to vector<2xf32>
      %26 = vector.shape_cast %25 : vector<2xf32> to vector<2x1xf32>
      %27 = vector.broadcast %26 : vector<2x1xf32> to vector<2x16xf32>
      %28 = arith.divf %24, %27 : vector<2x16xf32>
      %c0_21 = arith.constant 0 : index
      %c0_22 = arith.constant 0 : index
      %29 = vector.load %arg5[%c0_21, %c0_22] : memref<2x16xf32, #tpu.memory_space<vmem>>, vector<2x16xf32>
      tpu.vector_store %arg5[%c0_21, %c0_22], %28 {strides = array<i32>} : memref<2x16xf32, #tpu.memory_space<vmem>>, vector<2x16xf32>,
    } else {
    }
    return
  }
  func.func @transform_0(%arg0: i32, %arg1: i32) -> (i32, i32, i32) {
    %c0_i32 = arith.constant 0 : i32
    %c0_i32_0 = arith.constant 0 : i32
    return %arg0, %c0_i32, %arg1 : i32, i32, i32
  }
  func.func @transform_1(%arg0: i32, %arg1: i32) -> (i32, i32) {
    %c0_i32 = arith.constant 0 : i32
    %c0_i32_0 = arith.constant 0 : i32
    %c0_i32_1 = arith.constant 0 : i32
    return %c0_i32, %c0_i32_0 : i32, i32
  }
  func.func @transform_2(%arg0: i32, %arg1: i32) -> (i32, i32) {
    %c0_i32 = arith.constant 0 : i32
    %c0_i32_0 = arith.constant 0 : i32
    %c0_i32_1 = arith.constant 0 : i32
    return %c0_i32, %c0_i32_0 : i32, i32
  }
  func.func @transform_3(%arg0: i32, %arg1: i32) -> (i32, i32) {
    %c0_i32 = arith.constant 0 : i32
    %c0_i32_0 = arith.constant 0 : i32
    return %arg0, %c0_i32 : i32, i32
  }
  func.func @transform_4(%arg0: i32, %arg1: i32) -> (i32, i32) {
    %c0_i32 = arith.constant 0 : i32
    %c0_i32_0 = arith.constant 0 : i32
    return %arg0, %c0_i32 : i32, i32
  }
}

</mosaic_0001>

<llo_original>
// kernel: tpu_custom_call.1
$region0: #{tpu_custom_call.1}
  #allocation0 [shape = 'u32[]', space=smem, size = 0x4, offset = 0x4, fixed_abs, tag = 'smem constant byte address 0x4 - core index']
  #allocation1 [shape = 'u32[144,128]{1,0:T(1,128)}', space=vmem, size = 0x12000, scoped, tag = 'internal scratch']
  #allocation2 [shape = 'f32[2,32]{1,0:T(2,128)}', space=vmem, size = 0x400, scoped, tag = 'scratch operand']
  %s0 = inlined_call_operand.hbm [shape: f32[2,32,256], index: 0, kind: input, shape index: {}]
  %s1 = inlined_call_operand.vmem [shape: f32[32,16], index: 1, kind: input, shape index: {}]
  %s2 = inlined_call_operand.vmem [shape: f32[1,16], index: 2, kind: input, shape index: {}]
  %s3 = inlined_call_operand.hbm [shape: f32[2,16], index: 3, kind: output, shape index: {0}]
  %s4 = inlined_call_operand.hbm [shape: f32[2,32], index: 4, kind: output, shape index: {1}]
  %5 = xla_tuple %s3, %s4
  %s6 = sld [smem:[#allocation0]]
  $region42: #{tpu_custom_call.1} parent=0
    _
  %s8 = ssub.s32 1, %s6
  %s9 = scalar_select 0, %s8, %s6
  $region1: #{tpu_custom_call.1} parent=0
    #allocation3 [shape = 'u8[65536]{0}', space=vmem, size = 0x10000, scoped, tag = 'input window, operand 0, single buffered']
    #allocation4 [shape = 's32[1]{0}', space=sflag, size = 0x4, scoped, tag = 'scoped memory for tpu_custom_call.1']
    #allocation5 [shape = 's32[1]{0}', space=sflag, size = 0x4, scoped, tag = 'scoped memory for tpu_custom_call.1']
    #allocation6 [shape = 'u8[1024]{0}', space=vmem, size = 0x400, scoped, tag = 'output window, operand 0, single buffered']
    #allocation7 [shape = 'u8[1024]{0}', space=vmem, size = 0x400, scoped, tag = 'output window, operand 1, single buffered']
    #allocation8 [shape = 's32[1]{0}', space=sflag, size = 0x4, scoped, tag = 'scoped memory for tpu_custom_call.1']
    %10 = vsyncpa [#allocation4], 0
    %11 = vsyncpa [#allocation5], 0
    %12 = vsyncpa [#allocation8], 0
    // Predicated region
    $region2: #{tpu_custom_call.1} parent=1 // pred_check
      _
    $region3: #{tpu_custom_call.1} parent=1 // pred_check_branch
      %14 = sbr.rel (0) target = $region5
    $region4: #{tpu_custom_call.1} parent=1 // pred_region
      %s16 = ssub.s32 2048, 2048
      %17 = vsyncadd [#allocation4], %s16
      %s18 = sshll.u32 [#allocation3], 4
      %s19 = int_to_ptr.vmem [resolvable:$true] %s18
      %24 = dma.hbm_to_vmem [thread:$0]  %s0, 2048, %s19, [#allocation4], 256, 256, 16
    $region5: #{tpu_custom_call.1} parent=1 // pred_fallthru
      _
    // Predicated region
    $region6: #{tpu_custom_call.1} parent=1 // pred_check
      _
    $region7: #{tpu_custom_call.1} parent=1 // pred_check_branch
      %26 = sbr.rel (0) target = $region9
    $region8: #{tpu_custom_call.1} parent=1 // pred_region
      _
    $region9: #{tpu_custom_call.1} parent=1 // pred_fallthru
      _
    // Predicated region
    $region10: #{tpu_custom_call.1} parent=1 // pred_check
      _
    $region11: #{tpu_custom_call.1} parent=1 // pred_check_branch
      %28 = sbr.rel (0) target = $region13
    $region12: #{tpu_custom_call.1} parent=1 // pred_region
      _
    $region13: #{tpu_custom_call.1} parent=1 // pred_fallthru
      _
    // Predicated region
    $region14: #{tpu_custom_call.1} parent=1 // pred_check
      _
    $region15: #{tpu_custom_call.1} parent=1 // pred_check_branch
      %30 = sbr.rel (0) target = $region17
    $region16: #{tpu_custom_call.1} parent=1 // pred_region
      %31 = dma.done [#allocation4], 2048
    $region17: #{tpu_custom_call.1} parent=1 // pred_fallthru
      _
    %p32 = scmp.eq.s32.totalorder 0, 0
    // Predicated region
    $region18: #{tpu_custom_call.1} parent=1 // pred_check
      %p33 = pneg %p32
    $region19: #{tpu_custom_call.1} parent=1 // pred_check_branch
      %35 = sbr.rel (%p33) target = $region21
    $region20: #{tpu_custom_call.1} parent=1 // pred_region
      %vm36 = vcmask 254976
      %37 = vst.msk [vmem:[#allocation2] sm:$0x3] %vm36, 0.0
    $region21: #{tpu_custom_call.1} parent=1 // pred_fallthru
      _
    %v38 = vld [vmem:[#allocation2] sm:$0x3]
    %v39 = vld [vmem:[#allocation3] sm:$0xff]
    %v40 = vld [vmem:[#allocation3 + $0x8] sm:$0xff]
    %v41 = vld [vmem:[#allocation3 + $0x10] sm:$0xff]
    %v42 = vld [vmem:[#allocation3 + $0x18] sm:$0xff]
    %v43 = vld [vmem:[#allocation3 + $0x20] sm:$0xff]
    %v44 = vld [vmem:[#allocation3 + $0x28] sm:$0xff]
    %v45 = vld [vmem:[#allocation3 + $0x30] sm:$0xff]
    %v46 = vld [vmem:[#allocation3 + $0x38] sm:$0xff]
    %v47 = vld [vmem:[#allocation3 + $0x40] sm:$0xff]
    %v48 = vld [vmem:[#allocation3 + $0x48] sm:$0xff]
    %v49 = vld [vmem:[#allocation3 + $0x50] sm:$0xff]
    %v50 = vld [vmem:[#allocation3 + $0x58] sm:$0xff]
    %v51 = vld [vmem:[#allocation3 + $0x60] sm:$0xff]
    %v52 = vld [vmem:[#allocation3 + $0x68] sm:$0xff]
    %v53 = vld [vmem:[#allocation3 + $0x70] sm:$0xff]
    %v54 = vld [vmem:[#allocation3 + $0x78] sm:$0xff]
    %v55 = vadd.f32 %v39, %v40
    %56 = vadd.xlane.f32.xlu0 %v55
    %v57 = vpop.xlane.xlu0 %56
    %v58 = vadd.f32 %v41, %v42
    %59 = vadd.xlane.f32.xlu0 %v58
    %v60 = vpop.xlane.xlu0 %59
    %v61 = vadd.f32 %v43, %v44
    %62 = vadd.xlane.f32.xlu0 %v61
    %v63 = vpop.xlane.xlu0 %62
    %v64 = vadd.f32 %v45, %v46
    %65 = vadd.xlane.f32.xlu0 %v64
    %v66 = vpop.xlane.xlu0 %65
    %v67 = vadd.f32 %v47, %v48
    %68 = vadd.xlane.f32.xlu0 %v67
    %v69 = vpop.xlane.xlu0 %68
    %v70 = vadd.f32 %v49, %v50
    %71 = vadd.xlane.f32.xlu0 %v70
    %v72 = vpop.xlane.xlu0 %71
    %v73 = vadd.f32 %v51, %v52
    %74 = vadd.xlane.f32.xlu0 %v73
    %v75 = vpop.xlane.xlu0 %74
    %v76 = vadd.f32 %v53, %v54
    %77 = vadd.xlane.f32.xlu0 %v76
    %v78 = vpop.xlane.xlu0 %77
    %v87 = vlaneseq
    %v88 = vand.u32 %v87, 127
    %v89 = vlaneseq
    %v90 = vshrl.u32 %v89, 7
    %v91 = vsub.s32 %v88, %v90
    %v92 = vrot.slane %v57, %v91
    %v93 = vadd.s32 %v88, 4294967288
    %v94 = vlaneseq
    %v95 = vshrl.u32 %v94, 7
    %v96 = vsub.s32 %v93, %v95
    %v97 = vrot.slane %v60, %v96
    %vm98 = vcmask 130112
    %v99 = vsel %vm98, %v97, %v92
    %v100 = vadd.s32 %v88, 4294967280
    %v101 = vlaneseq
    %v102 = vshrl.u32 %v101, 7
    %v103 = vsub.s32 %v100, %v102
    %v104 = vrot.slane %v63, %v103
    %vm105 = vcmask 195712
    %v106 = vsel %vm105, %v104, %v99
    %v107 = vadd.s32 %v88, 4294967272
    %v108 = vlaneseq
    %v109 = vshrl.u32 %v108, 7
    %v110 = vsub.s32 %v107, %v109
    %v111 = vrot.slane %v66, %v110
    %vm112 = vcmask 261312
    %v113 = vsel %vm112, %v111, %v106
    %v114 = vlaneseq
    %v115 = vshrl.u32 %v114, 7
    %v116 = vsub.s32 %v88, %v115
    %v117 = vrot.slane %v69, %v116
    %v118 = vlaneseq
    %v119 = vshrl.u32 %v118, 7
    %v120 = vsub.s32 %v93, %v119
    %v121 = vrot.slane %v72, %v120
    %v122 = vsel %vm98, %v121, %v117
    %v123 = vlaneseq
    %v124 = vshrl.u32 %v123, 7
    %v125 = vsub.s32 %v100, %v124
    %v126 = vrot.slane %v75, %v125
    %v127 = vsel %vm105, %v126, %v122
    %v128 = vlaneseq
    %v129 = vshrl.u32 %v128, 7
    %v130 = vsub.s32 %v107, %v129
    %v131 = vrot.slane %v78, %v130
    %v132 = vsel %vm112, %v131, %v127
    %vm133 = vcmask 1041409
    %v134 = vsel %vm133, %v132, %v113
    %v136 = vadd.f32 %v38, %v134
    %vm137 = vcmask 254976
    %138 = vst.msk [vmem:[#allocation2] sm:$0x3] %vm137, %v136
    // Predicated region
    $region22: #{tpu_custom_call.1} parent=1 // pred_check
      %p139 = pneg %p32
    $region23: #{tpu_custom_call.1} parent=1 // pred_check_branch
      %141 = sbr.rel (%p139) target = $region25
    $region24: #{tpu_custom_call.1} parent=1 // pred_region
      %v142 = vld [vmem:[#allocation2] sm:$0x3]
      %v143 = vmul.f32 %v142, 0.00390625
      %144 = vst.msk [vmem:[#allocation7] sm:$0x3] %vm137, %v143
      %v145 = vld [vmem:[%s1] sm:$0xff]
      %v146 = vld [vmem:[%s1 + $0x8] sm:$0xff]
      %v147 = vld [vmem:[%s1 + $0x10] sm:$0xff]
      %v148 = vld [vmem:[%s1 + $0x18] sm:$0xff]
      %v149 = vld [vmem:[%s2] sm:$0x1]
      %v151 = vlaneseq
      %v152 = vshrl.u32 %v151, 7
      %v153 = vsub.s32 0, %v152
      %v154 = vrot.slane %v149, %v153
      %vm156 = vcmask 261120
      %v158 = vsel %vm156, %v143, 0
      %160 = vmatprep.subr.mxu0 0.0
      %161 = vmatpush1.msra.mxu0 0.0
      %162 = vmatprep.subr.mxu0 0.0
      %163 = vmatpush1.msra.mxu0 0.0
      %164 = vmatprep.subr.mxu0 0.0
      %165 = vmatpush1.msra.mxu0 0.0
      %166 = vmatprep.subr.mxu0 0.0
      %167 = vmatpush1.msra.mxu0 0.0
      %168 = vmatprep.subr.mxu0 0.0
      %169 = vmatpush1.msra.mxu0 0.0
      %170 = vmatprep.subr.mxu0 0.0
      %171 = vmatpush1.msra.mxu0 0.0
      %172 = vmatprep.subr.mxu0 0.0
      %173 = vmatpush1.msra.mxu0 0.0
      %174 = vmatprep.subr.mxu0 0.0
      %175 = vmatpush1.msra.mxu0 0.0
      %176 = vmatprep.subr.mxu0 0.0
      %177 = vmatpush1.msra.mxu0 0.0
      %178 = vmatprep.subr.mxu0 0.0
      %179 = vmatpush1.msra.mxu0 0.0
      %180 = vmatprep.subr.mxu0 0.0
      %181 = vmatpush1.msra.mxu0 0.0
      %182 = vmatprep.subr.mxu0 0.0
      %183 = vmatpush1.msra.mxu0 0.0
      %184 = vmatprep.subr.mxu0 0.0
      %185 = vmatpush1.msra.mxu0 %v148
      %186 = vmatprep.subr.mxu0 0.0
      %187 = vmatpush1.msra.mxu0 %v147
      %188 = vmatprep.subr.mxu0 0.0
      %189 = vmatpush1.msra.mxu0 %v146
      %190 = vmatprep.subr.mxu0 0.0
      %191 = vmatpush1.msra.mxu0 %v145
      %192 = vmatprep.subr.mxu0 0.0
      %193 = vmatpush2.msra.mxu0 0.0
      %194 = vmatprep.subr.mxu0 0.0
      %195 = vmatpush2.msra.mxu0 0.0
      %196 = vmatprep.subr.mxu0 0.0
      %197 = vmatpush2.msra.mxu0 0.0
      %198 = vmatprep.subr.mxu0 0.0
      %199 = vmatpush2.msra.mxu0 0.0
      %200 = vmatprep.subr.mxu0 0.0
      %201 = vmatpush2.msra.mxu0 0.0
      %202 = vmatprep.subr.mxu0 0.0
      %203 = vmatpush2.msra.mxu0 0.0
      %204 = vmatprep.subr.mxu0 0.0
      %205 = vmatpush2.msra.mxu0 0.0
      %206 = vmatprep.subr.mxu0 0.0
      %207 = vmatpush2.msra.mxu0 0.0
      %208 = vmatprep.subr.mxu0 0.0
      %209 = vmatpush2.msra.mxu0 0.0
      %210 = vmatprep.subr.mxu0 0.0
      %211 = vmatpush2.msra.mxu0 0.0
      %212 = vmatprep.subr.mxu0 0.0
      %213 = vmatpush2.msra.mxu0 0.0
      %214 = vmatprep.subr.mxu0 0.0
      %215 = vmatpush2.msra.mxu0 0.0
      %216 = vmatprep.subr.mxu0 0.0
      %217 = vmatpush2.msra.mxu0 0.0
      %218 = vmatprep.subr.mxu0 0.0
      %219 = vmatpush2.msra.mxu0 0.0
      %220 = vmatprep.subr.mxu0 0.0
      %221 = vmatpush2.msra.mxu0 0.0
      %222 = vmatprep.subr.mxu0 0.0
      %223 = vmatpush2.msra.mxu0 0.0
      %224 = vmatprep.mubr.f32.mxu0 0.0
      %225 = vmatmul.mubr.f32.gmra.mxu0 %v158
      %v226 = vpop.f32.mrf.mxu0
      %v227 = vadd.f32 %v154, %v226
      %v228 = vpop.f32.mrf.mxu0
      %229 = vdwg.mxu0
      %vm230 = vcmask 123904
      %v231 = vsel %vm230, %v227, -inf
      %232 = vmax.xlane.f32.xlu0 %v231
      %v233 = vpop.xlane.xlu0 %232
      %v234 = vsub.f32 %v227, %v233
      %v235 = vmul.f32 %v234, 1.442695
      %v236 = vpow.pop %v235
      %v237 = vsel %vm230, %v236, 0.0
      %238 = vadd.xlane.f32.xlu0 %v237
      %v239 = vpop.xlane.xlu0 %238
      %v240 = vrcp.pop %v239
      %v241 = vmul.f32 %v236, %v240
      %242 = vst.msk [vmem:[#allocation6] sm:$0x3] %vm230, %v241
    $region25: #{tpu_custom_call.1} parent=1 // pred_fallthru
      _
    // Predicated region
    $region26: #{tpu_custom_call.1} parent=1 // pred_check
      _
    $region27: #{tpu_custom_call.1} parent=1 // pred_check_branch
      %244 = sbr.rel (0) target = $region29
    $region28: #{tpu_custom_call.1} parent=1 // pred_region
      %s246 = ssub.s32 32, 32
      %247 = vsyncadd [#allocation5], %s246
      %s249 = sshll.u32 [#allocation6], 4
      %s250 = int_to_ptr.vmem [resolvable:$true] %s249
      %252 = dma.vmem_to_hbm [thread:$0]  %s250, 32, %s3, [#allocation5]
    $region29: #{tpu_custom_call.1} parent=1 // pred_fallthru
      _
    // Predicated region
    $region30: #{tpu_custom_call.1} parent=1 // pred_check
      _
    $region31: #{tpu_custom_call.1} parent=1 // pred_check_branch
      %254 = sbr.rel (0) target = $region33
    $region32: #{tpu_custom_call.1} parent=1 // pred_region
      %s256 = ssub.s32 32, 32
      %257 = vsyncadd [#allocation8], %s256
      %s259 = sshll.u32 [#allocation7], 4
      %s260 = int_to_ptr.vmem [resolvable:$true] %s259
      %262 = dma.vmem_to_hbm [thread:$0]  %s260, 32, %s4, [#allocation8]
    $region33: #{tpu_custom_call.1} parent=1 // pred_fallthru
      _
    // Predicated region
    $region34: #{tpu_custom_call.1} parent=1 // pred_check
      _
    $region35: #{tpu_custom_call.1} parent=1 // pred_check_branch
      %264 = sbr.rel (0) target = $region37
    $region36: #{tpu_custom_call.1} parent=1 // pred_region
      %265 = dma.done [#allocation5], 32
    $region37: #{tpu_custom_call.1} parent=1 // pred_fallthru
      _
    // Predicated region
    $region38: #{tpu_custom_call.1} parent=1 // pred_check
      _
    $region39: #{tpu_custom_call.1} parent=1 // pred_check_branch
      %267 = sbr.rel (0) target = $region41
    $region40: #{tpu_custom_call.1} parent=1 // pred_region
      %268 = dma.done [#allocation8], 32
    $region41: #{tpu_custom_call.1} parent=1 // pred_fallthru
      _
    %269 = vsyncpa [#allocation4], 1
    %270 = vsyncpa [#allocation5], 1
    %271 = vsyncpa [#allocation8], 1

</llo_original>
